<compile_context>
chip_gen: v7x
topology: tpu7x:2x2x1
jax: 0.10.0
libtpu: 0.0.40
codegen_flags: <defaults>
</compile_context>

<pallas_src>
import functools

import jax
import jax.numpy as jnp
from jax.experimental import pallas as pl
from jax.experimental.pallas import tpu as pltpu


def _round_up(x, m):
    return ((x + m - 1) // m) * m


# ----------------------------- Pallas kernel ------------------------------ #
def _make_root_kernel(num_inputs):
    """Kernel over refs: x_0..x_{k-1}, w_0..w_{k-1}, bias, out."""

    def kernel(*refs):
        x_refs = refs[:num_inputs]                 # each (C_i, TL)
        w_refs = refs[num_inputs:2 * num_inputs]   # each (Cout, C_i), BN-scaled
        bias_ref = refs[2 * num_inputs]            # (Cout, 1)
        o_ref = refs[2 * num_inputs + 1]           # (Cout, TL)

        acc = jnp.dot(w_refs[0][...], x_refs[0][...],
                      preferred_element_type=jnp.float32)
        for xr, wr in zip(x_refs[1:], w_refs[1:]):
            acc = acc + jnp.dot(wr[...], xr[...],
                                preferred_element_type=jnp.float32)
        y = acc + bias_ref[...]                    # broadcast over lanes
        o_ref[...] = jnp.maximum(y, 0.0).astype(o_ref.dtype)

    return kernel


def _root_matmul_bn_relu(x_list, w_list, bias, *, tl):
    """x_list[i]: (N, C_i, S_pad), w_list[i]: (Cout, C_i), bias: (Cout, 1).

    Returns (N, Cout, S_pad) = relu( sum_i W_i @ X_i + bias ), lane-dense.
    """
    N, _, s_pad = x_list[0].shape
    cout = w_list[0].shape[0]
    num_inputs = len(x_list)
    assert s_pad % tl == 0

    grid = (N, s_pad // tl)

    in_specs = []
    for x in x_list:
        c_i = x.shape[1]
        in_specs.append(
            pl.BlockSpec((None, c_i, tl), lambda n, s: (n, 0, s)))
    for w in w_list:
        in_specs.append(pl.BlockSpec(w.shape, lambda n, s: (0, 0)))
    in_specs.append(pl.BlockSpec((cout, 1), lambda n, s: (0, 0)))

    out_specs = pl.BlockSpec((None, cout, tl), lambda n, s: (n, 0, s))

    cin_total = sum(x.shape[1] for x in x_list)
    cost = pl.CostEstimate(
        flops=2 * N * s_pad * cin_total * cout,
        transcendentals=0,
        bytes_accessed=4 * N * s_pad * (cin_total + cout),
    )

    return pl.pallas_call(
        _make_root_kernel(num_inputs),
        out_shape=jax.ShapeDtypeStruct((N, cout, s_pad), jnp.float32),
        grid_spec=pltpu.PrefetchScalarGridSpec(
            num_scalar_prefetch=0,
            grid=grid,
            in_specs=in_specs,
            out_specs=out_specs,
        ),
        compiler_params=pltpu.CompilerParams(
            dimension_semantics=("parallel", "parallel"),
        ),
        cost_estimate=cost,
    )(*x_list, *w_list, bias)


# ------------------------------ JAX glue ----------------------------------- #
def spectral_normalize_weight(w, n_power_iterations=5):
    """miyato spectral norm of a (Cout, Cin, 1, 1) conv weight (deterministic)."""
    cout = w.shape[0]
    w2d = w.reshape(cout, -1)  # (Cout, Cin*k*k)
    # Deterministic u init (PyTorch uses a random normal; fixed here).
    u = jnp.ones((cout,), jnp.float32) / jnp.sqrt(jnp.float32(cout))
    for _ in range(n_power_iterations):
        v = w2d.T @ u
        v = v / (jnp.linalg.norm(v) + 1e-12)
        u = w2d @ v
        u = u / (jnp.linalg.norm(u) + 1e-12)
    sigma = u @ (w2d @ v)
    return w / sigma


def fold_batchnorm(gamma, beta, running_mean, running_var, eps=1e-5):
    scale = gamma / jnp.sqrt(running_var + eps)
    bias = beta - running_mean * scale
    return scale, bias


@functools.partial(jax.jit, static_argnames=("bn",))
def root_forward(xs, w_conv, gamma, beta, running_mean, running_var, *, bn=True):
    """xs: tuple of NCHW arrays. Returns NCHW output of Root.forward."""
    N, _, H, W = xs[0].shape
    S = H * W
    cout = w_conv.shape[0]
    c_splits = [x.shape[1] for x in xs]
    cin = sum(c_splits)
    assert w_conv.shape[1] == cin

    # ---- Parameter prep (glue, runs once per call on tiny tensors) ----
    w_sn = spectral_normalize_weight(w_conv).reshape(cout, cin)
    if bn:
        scale, bias = fold_batchnorm(gamma, beta, running_mean, running_var)
    else:
        scale = jnp.ones((cout,), jnp.float32)
        bias = jnp.zeros((cout,), jnp.float32)
    w_scaled = w_sn * scale[:, None]          # fold BN scale into the weight
    bias2d = bias.reshape(cout, 1).astype(jnp.float32)

    # Split weight along Cin to match xs (so no activation concat is needed).
    w_list = []
    off = 0
    for c in c_splits:
        w_list.append(w_scaled[:, off:off + c].astype(jnp.float32))
        off += c

    # ---- Spatial tiling: keep lanes dense (multiple of 128), big tiles ----
    tl = min(2048, _round_up(S, 128))
    s_pad = _round_up(S, tl)

    x_list = []
    for x in xs:
        xm = x.reshape(N, x.shape[1], S)      # contiguous, no transpose
        if s_pad != S:
            xm = jnp.pad(xm, ((0, 0), (0, 0), (0, s_pad - S)))
        x_list.append(xm.astype(jnp.float32))

    out = _root_matmul_bn_relu(x_list, w_list, bias2d, tl=tl)
    out = out[:, :, :S].reshape(N, cout, H, W)   # drop padded spatial columns
    return out


# --------------------------- reference (pure JAX) --------------------------- #
def root_forward_ref(xs, w_conv, gamma, beta, running_mean, running_var):
    x = jnp.concatenate(xs, axis=1)
    w_sn = spectral_normalize_weight(w_conv)
    y = jax.lax.conv_general_dilated(
        x, w_sn, window_strides=(1, 1), padding="VALID",
        dimension_numbers=("NCHW", "OIHW", "NCHW"))
    scale, bias = fold_batchnorm(gamma, beta, running_mean, running_var)
    y = y * scale[None, :, None, None] + bias[None, :, None, None]
    return jnp.maximum(y, 0.0)


# --------------------------------- main ------------------------------------ #
if __name__ == "__main__":
    key = jax.random.PRNGKey(0)
    k1, k2, kw, kg, kb, km, kv = jax.random.split(key, 7)

    # Small shapes: two feature maps of (N=2, C=4, H=16, W=16) -> Cin = 8.
    N, C_each, H, W = 2, 4, 16, 16
    Cin = 2 * C_each
    Cout = 8

    x1 = jax.random.normal(k1, (N, C_each, H, W), jnp.float32)
    x2 = jax.random.normal(k2, (N, C_each, H, W), jnp.float32)

    # Deterministic parameter init (shapes from Root.__init__, kernel_size=1).
    w_conv = jax.random.normal(kw, (Cout, Cin, 1, 1), jnp.float32) * 0.1
    gamma = 1.0 + 0.1 * jax.random.normal(kg, (Cout,), jnp.float32)
    beta = 0.1 * jax.random.normal(kb, (Cout,), jnp.float32)
    running_mean = 0.1 * jax.random.normal(km, (Cout,), jnp.float32)
    running_var = 1.0 + 0.1 * jax.random.uniform(kv, (Cout,), jnp.float32)

    out = root_forward((x1, x2), w_conv, gamma, beta, running_mean, running_var)
    out = jax.block_until_ready(out)

    ref = root_forward_ref((x1, x2), w_conv, gamma, beta, running_mean, running_var)
    assert out.shape == (N, Cout, H, W)
    assert jnp.allclose(out, ref, atol=1e-4, rtol=1e-4)

    print("KERNEL_OK")
</pallas_src>

<mosaic_0001>
module attributes {stable_mosaic.version = 11 : i64} {
  func.func @kernel(%arg0: i32, %arg1: i32, %arg2: memref<1x4x256xf32, #tpu.memory_space<vmem>>, %arg3: memref<1x4x256xf32, #tpu.memory_space<vmem>>, %arg4: memref<8x4xf32, #tpu.memory_space<vmem>>, %arg5: memref<8x4xf32, #tpu.memory_space<vmem>>, %arg6: memref<8x1xf32, #tpu.memory_space<vmem>>, %arg7: memref<1x8x256xf32, #tpu.memory_space<vmem>>) attributes {dimension_semantics = [#tpu.dimension_semantics<parallel>, #tpu.dimension_semantics<parallel>], iteration_bounds = array<i64: 2, 1>, scalar_prefetch = 0 : i64, scratch_operands = 0 : i64, tpu.core_type = #tpu.core_type<tc>, window_params = [{transform_indices = @transform_0, window_bounds = array<i64: 1, 4, 256>}, {transform_indices = @transform_1, window_bounds = array<i64: 1, 4, 256>}, {pipeline_mode = #tpu.pipeline_mode<synchronous>, transform_indices = @transform_2, window_bounds = array<i64: 8, 4>}, {pipeline_mode = #tpu.pipeline_mode<synchronous>, transform_indices = @transform_3, window_bounds = array<i64: 8, 4>}, {pipeline_mode = #tpu.pipeline_mode<synchronous>, transform_indices = @transform_4, window_bounds = array<i64: 8, 1>}, {transform_indices = @transform_5, window_bounds = array<i64: 1, 8, 256>}]} {
    %c0 = arith.constant 0 : index
    %c0_0 = arith.constant 0 : index
    %0 = vector.load %arg4[%c0, %c0_0] : memref<8x4xf32, #tpu.memory_space<vmem>>, vector<8x4xf32>
    %c0_1 = arith.constant 0 : index
    %c0_2 = arith.constant 0 : index
    %c0_3 = arith.constant 0 : index
    %1 = vector.load %arg2[%c0_1, %c0_2, %c0_3] : memref<1x4x256xf32, #tpu.memory_space<vmem>>, vector<1x4x256xf32>
    %2 = vector.shape_cast %1 : vector<1x4x256xf32> to vector<4x256xf32>
    %cst = arith.constant dense<0.000000e+00> : vector<8x256xf32>
    %3 = tpu.matmul %0, %2, %cst {dimension_numbers = #tpu.dot_dimension_numbers<[1], [0], [0], [1], [0, 0, 1, 1], [], []>} : vector<8x4xf32>, vector<4x256xf32>, vector<8x256xf32> -> vector<8x256xf32>
    %c0_4 = arith.constant 0 : index
    %c0_5 = arith.constant 0 : index
    %4 = vector.load %arg5[%c0_4, %c0_5] : memref<8x4xf32, #tpu.memory_space<vmem>>, vector<8x4xf32>
    %c0_6 = arith.constant 0 : index
    %c0_7 = arith.constant 0 : index
    %c0_8 = arith.constant 0 : index
    %5 = vector.load %arg3[%c0_6, %c0_7, %c0_8] : memref<1x4x256xf32, #tpu.memory_space<vmem>>, vector<1x4x256xf32>
    %6 = vector.shape_cast %5 : vector<1x4x256xf32> to vector<4x256xf32>
    %cst_9 = arith.constant dense<0.000000e+00> : vector<8x256xf32>
    %7 = tpu.matmul %4, %6, %cst_9 {dimension_numbers = #tpu.dot_dimension_numbers<[1], [0], [0], [1], [0, 0, 1, 1], [], []>} : vector<8x4xf32>, vector<4x256xf32>, vector<8x256xf32> -> vector<8x256xf32>
    %8 = arith.addf %3, %7 : vector<8x256xf32>
    %c0_10 = arith.constant 0 : index
    %c0_11 = arith.constant 0 : index
    %9 = vector.load %arg6[%c0_10, %c0_11] : memref<8x1xf32, #tpu.memory_space<vmem>>, vector<8x1xf32>
    %10 = vector.broadcast %9 : vector<8x1xf32> to vector<8x256xf32>
    %11 = arith.addf %8, %10 : vector<8x256xf32>
    %cst_12 = arith.constant 0.000000e+00 : f32
    %12 = vector.broadcast %cst_12 : f32 to vector<8x256xf32>
    %13 = arith.maximumf %11, %12 : vector<8x256xf32>
    %c0_13 = arith.constant 0 : index
    %c0_14 = arith.constant 0 : index
    %c0_15 = arith.constant 0 : index
    %14 = vector.load %arg7[%c0_13, %c0_14, %c0_15] : memref<1x8x256xf32, #tpu.memory_space<vmem>>, vector<1x8x256xf32>
    %15 = vector.shape_cast %14 : vector<1x8x256xf32> to vector<8x256xf32>
    %16 = vector.shape_cast %13 : vector<8x256xf32> to vector<1x8x256xf32>
    tpu.vector_store %arg7[%c0_13, %c0_14, %c0_15], %16 {strides = array<i32>} : memref<1x8x256xf32, #tpu.memory_space<vmem>>, vector<1x8x256xf32>,
    return
  }
  func.func @transform_0(%arg0: i32, %arg1: i32) -> (i32, i32, i32) {
    %c0_i32 = arith.constant 0 : i32
    %c0_i32_0 = arith.constant 0 : i32
    return %arg0, %c0_i32, %arg1 : i32, i32, i32
  }
  func.func @transform_1(%arg0: i32, %arg1: i32) -> (i32, i32, i32) {
    %c0_i32 = arith.constant 0 : i32
    %c0_i32_0 = arith.constant 0 : i32
    return %arg0, %c0_i32, %arg1 : i32, i32, i32
  }
  func.func @transform_2(%arg0: i32, %arg1: i32) -> (i32, i32) {
    %c0_i32 = arith.constant 0 : i32
    %c0_i32_0 = arith.constant 0 : i32
    %c0_i32_1 = arith.constant 0 : i32
    return %c0_i32, %c0_i32_0 : i32, i32
  }
  func.func @transform_3(%arg0: i32, %arg1: i32) -> (i32, i32) {
    %c0_i32 = arith.constant 0 : i32
    %c0_i32_0 = arith.constant 0 : i32
    %c0_i32_1 = arith.constant 0 : i32
    return %c0_i32, %c0_i32_0 : i32, i32
  }
  func.func @transform_4(%arg0: i32, %arg1: i32) -> (i32, i32) {
    %c0_i32 = arith.constant 0 : i32
    %c0_i32_0 = arith.constant 0 : i32
    %c0_i32_1 = arith.constant 0 : i32
    return %c0_i32, %c0_i32_0 : i32, i32
  }
  func.func @transform_5(%arg0: i32, %arg1: i32) -> (i32, i32, i32) {
    %c0_i32 = arith.constant 0 : i32
    %c0_i32_0 = arith.constant 0 : i32
    return %arg0, %c0_i32, %arg1 : i32, i32, i32
  }
}

</mosaic_0001>

<llo_original>
// kernel: root_forward.1
$region0: #{root_forward.1}
  #allocation0 [shape = 'u32[]', space=smem, size = 0x4, offset = 0x4, fixed_abs, tag = 'smem constant byte address 0x4 - core index']
  #allocation1 [shape = 'u32[144,128]{1,0:T(1,128)}', space=vmem, size = 0x12000, scoped, tag = 'internal scratch']
  %s0 = inlined_call_operand.vmem [shape: f32[2,4,256], index: 0, kind: input, shape index: {}]
  %s1 = inlined_call_operand.vmem [shape: f32[2,4,256], index: 1, kind: input, shape index: {}]
  %s2 = inlined_call_operand.vmem [shape: f32[8,4], index: 2, kind: input, shape index: {}]
  %s3 = inlined_call_operand.vmem [shape: f32[8,4], index: 3, kind: input, shape index: {}]
  %s4 = inlined_call_operand.vmem [shape: f32[8,1], index: 4, kind: input, shape index: {}]
  %s5 = inlined_call_operand.vmem [shape: f32[2,8,256], index: 5, kind: output, shape index: {}]
  %s6 = sld [smem:[#allocation0]]
  $region53: #{root_forward.1} parent=0
    _
  %s8 = ssub.s32 1, %s6
  %s9 = scalar_select 0, %s8, %s6
  loop: start=0, step=1, limit=4
  $region2: #{root_forward.1} parent=0 // loop_pre_header
    _
  $region3: #{root_forward.1} parent=0 // loop_header
    %s11 = sphi 0, %s15
    %p12 = scmp.ge.s32.totalorder %s11, 4
    %s18 = sphi 0, %s30
    %s19 = sphi 0, %s26
    %s20 = sphi 0, %s18
    %s21 = sphi 0, %s19
    %s22 = sphi 0, %s20
    %s23 = sphi 0, %s21
    %s35 = sphi 0, %s37
    %s38 = sphi 0, %s35
    %s39 = sphi 0, %s38
    %s55 = sphi 0, %s39
    %s63 = sphi 0, %s65
    %s66 = sphi 0, %s63
    %s67 = sphi 0, %s66
    %s83 = sphi 0, %s67
    %s87 = sphi 0, %s87
    %s89 = sphi 0, %s87
    %s90 = sphi 0, %s89
    %s104 = sphi 0, %s90
    %s108 = sphi 0, %s108
    %s110 = sphi 0, %s108
    %s111 = sphi 0, %s110
    %s125 = sphi 0, %s111
    %s129 = sphi 0, %s129
    %s131 = sphi 0, %s129
    %s132 = sphi 0, %s131
    %s146 = sphi 0, %s132
    %s154 = sphi 0, %s156
    %s157 = sphi 0, %s154
    %s158 = sphi 0, %s157
    %s174 = sphi 0, %s158
  $region4: #{root_forward.1} parent=0 // loop_header_branch
    %14 = sbr.rel (%p12) target = $region8
  $region5: #{root_forward.1} parent=0 // loop_body
    %s16 = ssub.s32 %s11, 1
    %s17 = ssub.s32 %s11, 2
    %s24 = sadd.s32 1, %s19
    %p25 = scmp.ge.s32.totalorder %s24, 1
    %s26 = scalar_select %p25, 0, %s24
    %s27 = sadd.s32 1, %s18
    %s28 = scalar_select %p25, %s27, %s18
    %p29 = scmp.ge.s32.totalorder %s28, 2
    %s30 = scalar_select %p29, 0, %s28
    %s31 = ssub.s32 %s18, %s30
    %s32 = ssub.s32 %s19, %s26
    %s33 = sor.u32 %s31, %s32
    %p34 = scmp.eq.s32.totalorder %s33, 0
    %s36 = sadd.s32 %s35, 1
    %s37 = scalar_select %p34, %s35, %s36
    %p40 = pneg %p34
    %p41 = scmp.eq.s32.totalorder %s11, 1
    %p42 = por %p40, %p41
    %p43 = scmp.ne.s32.totalorder %s35, %s38
    %p44 = scmp.eq.s32.totalorder %s11, 0
    %p45 = por %p43, %p44
    %p46 = scmp.ne.s32.totalorder %s35, %s38
    %p47 = scmp.eq.s32.totalorder %s16, 1
    %p48 = por %p46, %p47
    %p49 = scmp.ne.s32.totalorder %s38, %s39
    %p50 = scmp.eq.s32.totalorder %s16, 0
    %p51 = por %p49, %p50
    %p52 = scmp.ne.s32.totalorder %s38, %s39
    %p53 = scmp.eq.s32.totalorder %s17, 1
    %p54 = por %p52, %p53
    %p56 = scmp.ne.s32.totalorder %s39, %s55
    %p57 = scmp.eq.s32.totalorder %s17, 0
    %p58 = por %p56, %p57
    %s59 = ssub.s32 %s18, %s30
    %s60 = ssub.s32 %s19, %s26
    %s61 = sor.u32 %s59, %s60
    %p62 = scmp.eq.s32.totalorder %s61, 0
    %s64 = sadd.s32 %s63, 1
    %s65 = scalar_select %p62, %s63, %s64
    %p68 = pneg %p62
    %p69 = scmp.eq.s32.totalorder %s11, 1
    %p70 = por %p68, %p69
    %p71 = scmp.ne.s32.totalorder %s63, %s66
    %p72 = scmp.eq.s32.totalorder %s11, 0
    %p73 = por %p71, %p72
    %p74 = scmp.ne.s32.totalorder %s63, %s66
    %p75 = scmp.eq.s32.totalorder %s16, 1
    %p76 = por %p74, %p75
    %p77 = scmp.ne.s32.totalorder %s66, %s67
    %p78 = scmp.eq.s32.totalorder %s16, 0
    %p79 = por %p77, %p78
    %p80 = scmp.ne.s32.totalorder %s66, %s67
    %p81 = scmp.eq.s32.totalorder %s17, 1
    %p82 = por %p80, %p81
    %p84 = scmp.ne.s32.totalorder %s67, %s83
    %p85 = scmp.eq.s32.totalorder %s17, 0
    %p86 = por %p84, %p85
    %s88 = sadd.s32 %s87, 1
    %p91 = scmp.eq.s32.totalorder %s11, 1
    %p92 = scmp.ne.s32.totalorder %s87, %s89
    %p93 = scmp.eq.s32.totalorder %s11, 0
    %p94 = por %p92, %p93
    %p95 = scmp.ne.s32.totalorder %s87, %s89
    %p96 = scmp.eq.s32.totalorder %s16, 1
    %p97 = por %p95, %p96
    %p98 = scmp.ne.s32.totalorder %s89, %s90
    %p99 = scmp.eq.s32.totalorder %s16, 0
    %p100 = por %p98, %p99
    %p101 = scmp.ne.s32.totalorder %s89, %s90
    %p102 = scmp.eq.s32.totalorder %s17, 1
    %p103 = por %p101, %p102
    %p105 = scmp.ne.s32.totalorder %s90, %s104
    %p106 = scmp.eq.s32.totalorder %s17, 0
    %p107 = por %p105, %p106
    %s109 = sadd.s32 %s108, 1
    %p112 = scmp.eq.s32.totalorder %s11, 1
    %p113 = scmp.ne.s32.totalorder %s108, %s110
    %p114 = scmp.eq.s32.totalorder %s11, 0
    %p115 = por %p113, %p114
    %p116 = scmp.ne.s32.totalorder %s108, %s110
    %p117 = scmp.eq.s32.totalorder %s16, 1
    %p118 = por %p116, %p117
    %p119 = scmp.ne.s32.totalorder %s110, %s111
    %p120 = scmp.eq.s32.totalorder %s16, 0
    %p121 = por %p119, %p120
    %p122 = scmp.ne.s32.totalorder %s110, %s111
    %p123 = scmp.eq.s32.totalorder %s17, 1
    %p124 = por %p122, %p123
    %p126 = scmp.ne.s32.totalorder %s111, %s125
    %p127 = scmp.eq.s32.totalorder %s17, 0
    %p128 = por %p126, %p127
    %s130 = sadd.s32 %s129, 1
    %p133 = scmp.eq.s32.totalorder %s11, 1
    %p134 = scmp.ne.s32.totalorder %s129, %s131
    %p135 = scmp.eq.s32.totalorder %s11, 0
    %p136 = por %p134, %p135
    %p137 = scmp.ne.s32.totalorder %s129, %s131
    %p138 = scmp.eq.s32.totalorder %s16, 1
    %p139 = por %p137, %p138
    %p140 = scmp.ne.s32.totalorder %s131, %s132
    %p141 = scmp.eq.s32.totalorder %s16, 0
    %p142 = por %p140, %p141
    %p143 = scmp.ne.s32.totalorder %s131, %s132
    %p144 = scmp.eq.s32.totalorder %s17, 1
    %p145 = por %p143, %p144
    %p147 = scmp.ne.s32.totalorder %s132, %s146
    %p148 = scmp.eq.s32.totalorder %s17, 0
    %p149 = por %p147, %p148
    %s150 = ssub.s32 %s18, %s30
    %s151 = ssub.s32 %s19, %s26
    %s152 = sor.u32 %s150, %s151
    %p153 = scmp.eq.s32.totalorder %s152, 0
    %s155 = sadd.s32 %s154, 1
    %s156 = scalar_select %p153, %s154, %s155
    %p159 = pneg %p153
    %p160 = scmp.eq.s32.totalorder %s11, 1
    %p161 = por %p159, %p160
    %p162 = scmp.ne.s32.totalorder %s154, %s157
    %p163 = scmp.eq.s32.totalorder %s11, 0
    %p164 = por %p162, %p163
    %p165 = scmp.ne.s32.totalorder %s154, %s157
    %p166 = scmp.eq.s32.totalorder %s16, 1
    %p167 = por %p165, %p166
    %p168 = scmp.ne.s32.totalorder %s157, %s158
    %p169 = scmp.eq.s32.totalorder %s16, 0
    %p170 = por %p168, %p169
    %p171 = scmp.ne.s32.totalorder %s157, %s158
    %p172 = scmp.eq.s32.totalorder %s17, 1
    %p173 = por %p171, %p172
    %p175 = scmp.ne.s32.totalorder %s158, %s174
    %p176 = scmp.eq.s32.totalorder %s17, 0
    %p177 = por %p175, %p176
    %p178 = scmp.le.s32.totalorder 1, %s11
    %p179 = scmp.lt.s32.totalorder %s11, 3
    %p180 = pnand %p178, %p179
    %p181 = pneg %p180
    // Predicated region
    $region9: #{root_forward.1} parent=5 // pred_check
      _
    $region10: #{root_forward.1} parent=5 // pred_check_branch
      %183 = sbr.rel (%p180) target = $region12
    $region11: #{root_forward.1} parent=5 // pred_region
      %s184 = ssub.s32 %s11, 1
      // Predicated region
      $region13: #{root_forward.1} parent=11 // pred_check
        %p185 = pneg %p100
      $region14: #{root_forward.1} parent=11 // pred_check_branch
        %187 = sbr.rel (%p185) target = $region16
      $region15: #{root_forward.1} parent=11 // pred_region
        _
      $region16: #{root_forward.1} parent=11 // pred_fallthru
        _
      // Predicated region
      $region17: #{root_forward.1} parent=11 // pred_check
        %p188 = pneg %p121
      $region18: #{root_forward.1} parent=11 // pred_check_branch
        %190 = sbr.rel (%p188) target = $region20
      $region19: #{root_forward.1} parent=11 // pred_region
        _
      $region20: #{root_forward.1} parent=11 // pred_fallthru
        _
      // Predicated region
      $region21: #{root_forward.1} parent=11 // pred_check
        %p191 = pneg %p142
      $region22: #{root_forward.1} parent=11 // pred_check_branch
        %193 = sbr.rel (%p191) target = $region24
      $region23: #{root_forward.1} parent=11 // pred_region
        _
      $region24: #{root_forward.1} parent=11 // pred_fallthru
        _
    $region12: #{root_forward.1} parent=5 // pred_fallthru
      _
    %p194 = scmp.lt.s32.totalorder %s11, 2
    // Predicated region
    $region25: #{root_forward.1} parent=5 // pred_check
      %p195 = pneg %p194
    $region26: #{root_forward.1} parent=5 // pred_check_branch
      %197 = sbr.rel (%p195) target = $region28
    $region27: #{root_forward.1} parent=5 // pred_region
      // Predicated region
      $region29: #{root_forward.1} parent=27 // pred_check
        %p198 = pneg %p45
      $region30: #{root_forward.1} parent=27 // pred_check_branch
        %200 = sbr.rel (%p198) target = $region32
      $region31: #{root_forward.1} parent=27 // pred_region
        %s201 = smul.u32 2, %s19
        %p202 = scmp.lt.s32.totalorder %s18, 1
        %s203 = scalar_select %p202, %s18, 1
        %p204 = scmp.lt.s32.totalorder %s201, 1
        %s205 = scalar_select %p204, %s201, 1
        %s206 = smul.addr %s203, 2
        %s207 = sadd.s32 %s205, %s206
        %s208 = smul.addr %s207, 4
        %s209 = scalar_lea.vmem %s0, %s208
        %s210 = smul.u32 2, %s19
      $region32: #{root_forward.1} parent=27 // pred_fallthru
        _
      // Predicated region
      $region33: #{root_forward.1} parent=27 // pred_check
        %p211 = pneg %p73
      $region34: #{root_forward.1} parent=27 // pred_check_branch
        %213 = sbr.rel (%p211) target = $region36
      $region35: #{root_forward.1} parent=27 // pred_region
        %s214 = smul.u32 2, %s19
        %p215 = scmp.lt.s32.totalorder %s18, 1
        %s216 = scalar_select %p215, %s18, 1
        %p217 = scmp.lt.s32.totalorder %s214, 1
        %s218 = scalar_select %p217, %s214, 1
        %s219 = smul.addr %s216, 2
        %s220 = sadd.s32 %s218, %s219
        %s221 = smul.addr %s220, 4
        %s222 = scalar_lea.vmem %s1, %s221
        %s223 = smul.u32 2, %s19
      $region36: #{root_forward.1} parent=27 // pred_fallthru
        _
    $region28: #{root_forward.1} parent=5 // pred_fallthru
      _
    %p224 = scmp.le.s32.totalorder 1, %s11
    %p225 = scmp.lt.s32.totalorder %s11, 3
    %p226 = pnand %p224, %p225
    %p227 = pneg %p226
    // Predicated region
    $region37: #{root_forward.1} parent=5 // pred_check
      _
    $region38: #{root_forward.1} parent=5 // pred_check_branch
      %229 = sbr.rel (%p226) target = $region40
    $region39: #{root_forward.1} parent=5 // pred_region
      %s230 = ssub.s32 %s11, 1
      %s231 = smul.u32 2, %s21
      %p232 = scmp.lt.s32.totalorder %s20, 1
      %s233 = scalar_select %p232, %s20, 1
      %p234 = scmp.lt.s32.totalorder %s231, 1
      %s235 = scalar_select %p234, %s231, 1
      %s236 = smul.addr %s233, 2
      %s237 = sadd.s32 %s235, %s236
      %s238 = smul.addr %s237, 4
      %s239 = scalar_lea.vmem %s0, %s238
      %p240 = pneg %p51
      %p241 = pneg %p48
      %s242 = smul.u32 2, %s21
      %p243 = scmp.lt.s32.totalorder %s20, 1
      %s244 = scalar_select %p243, %s20, 1
      %p245 = scmp.lt.s32.totalorder %s242, 1
      %s246 = scalar_select %p245, %s242, 1
      %s247 = smul.addr %s244, 2
      %s248 = sadd.s32 %s246, %s247
      %s249 = smul.addr %s248, 4
      %s250 = scalar_lea.vmem %s1, %s249
      %p251 = pneg %p79
      %p252 = pneg %p76
      %p253 = pneg %p100
      %p254 = pneg %p97
      %p255 = pneg %p121
      %p256 = pneg %p118
      %p257 = pneg %p142
      %p258 = pneg %p139
      %p259 = pneg %p170
      %p260 = pneg %p167
      %s261 = smul.u32 2, %s21
      %p262 = scmp.lt.s32.totalorder %s20, 1
      %s263 = scalar_select %p262, %s20, 1
      %p264 = scmp.lt.s32.totalorder %s261, 1
      %s265 = scalar_select %p264, %s261, 1
      %s266 = smul.addr %s263, 2
      %s267 = sadd.s32 %s265, %s266
      %s268 = smul.addr %s267, 8
      %s269 = scalar_lea.vmem %s5, %s268
      %s270 = smul.u32 2, %s21
      %p271 = scmp.lt.s32.totalorder %s20, 1
      %s272 = scalar_select %p271, %s20, 1
      %p273 = scmp.lt.s32.totalorder %s270, 1
      %s274 = scalar_select %p273, %s270, 1
      %s275 = smul.addr %s272, 2
      %s276 = sadd.s32 %s274, %s275
      %s277 = smul.addr %s276, 4
      %s278 = scalar_lea.vmem %s0, %s277
      %s279 = smul.u32 2, %s21
      %s280 = smul.u32 2, %s21
      %p281 = scmp.lt.s32.totalorder %s20, 1
      %s282 = scalar_select %p281, %s20, 1
      %p283 = scmp.lt.s32.totalorder %s280, 1
      %s284 = scalar_select %p283, %s280, 1
      %s285 = smul.addr %s282, 2
      %s286 = sadd.s32 %s284, %s285
      %s287 = smul.addr %s286, 4
      %s288 = scalar_lea.vmem %s1, %s287
      %s289 = smul.u32 2, %s21
      %s290 = smul.u32 2, %s21
      %p291 = scmp.lt.s32.totalorder %s20, 1
      %s292 = scalar_select %p291, %s20, 1
      %p293 = scmp.lt.s32.totalorder %s290, 1
      %s294 = scalar_select %p293, %s290, 1
      %s295 = smul.addr %s292, 2
      %s296 = sadd.s32 %s294, %s295
      %s297 = smul.addr %s296, 8
      %s298 = scalar_lea.vmem %s5, %s297
      %s299 = smul.u32 2, %s21
      %v300 = vld [vmem:[%s2] sm:$0xff]
      %v301 = vld [vmem:[%s278] sm:$0xff]
      %v302 = vld [vmem:[%s3] sm:$0xff]
      %v303 = vld [vmem:[%s288] sm:$0xff]
      %v305 = vcombine.high %v303, %v303
      %vm306 = vcmask 31744
      %v308 = vsel %vm306, %v302, 0
      %vm310 = vcmask 1043456
      %v311 = vsel %vm310, %v303, 0
      %v313 = vsel %vm310, %v305, 0
      %315 = vmatprep.subr.mxu0 %v313
      %316 = vmatpush1.msra.mxu0 %v311
      %317 = vmatprep.subr.mxu0 0.0
      %318 = vmatpush1.msra.mxu0 0.0
      %319 = vmatprep.subr.mxu0 0.0
      %320 = vmatpush1.msra.mxu0 0.0
      %321 = vmatprep.subr.mxu0 0.0
      %322 = vmatpush1.msra.mxu0 0.0
      %323 = vmatprep.subr.mxu0 0.0
      %324 = vmatpush1.msra.mxu0 0.0
      %325 = vmatprep.subr.mxu0 0.0
      %326 = vmatpush1.msra.mxu0 0.0
      %327 = vmatprep.subr.mxu0 0.0
      %328 = vmatpush1.msra.mxu0 0.0
      %329 = vmatprep.subr.mxu0 0.0
      %330 = vmatpush1.msra.mxu0 0.0
      %331 = vmatprep.subr.mxu0 0.0
      %332 = vmatpush1.msra.mxu0 0.0
      %333 = vmatprep.subr.mxu0 0.0
      %334 = vmatpush1.msra.mxu0 0.0
      %335 = vmatprep.subr.mxu0 0.0
      %336 = vmatpush1.msra.mxu0 0.0
      %337 = vmatprep.subr.mxu0 0.0
      %338 = vmatpush1.msra.mxu0 0.0
      %339 = vmatprep.subr.mxu0 0.0
      %340 = vmatpush1.msra.mxu0 0.0
      %341 = vmatprep.subr.mxu0 0.0
      %342 = vmatpush1.msra.mxu0 0.0
      %343 = vmatprep.subr.mxu0 0.0
      %344 = vmatpush1.msra.mxu0 0.0
      %345 = vmatprep.subr.mxu0 0.0
      %346 = vmatpush1.msra.mxu0 0.0
      %347 = vmatprep.subr.mxu0 0.0
      %348 = vmatpush1.msra.mxu0 0.0
      %349 = vmatprep.subr.mxu0 0.0
      %350 = vmatpush1.msra.mxu0 0.0
      %351 = vmatprep.subr.mxu0 0.0
      %352 = vmatpush1.msra.mxu0 0.0
      %353 = vmatprep.subr.mxu0 0.0
      %354 = vmatpush1.msra.mxu0 0.0
      %355 = vmatprep.subr.mxu0 0.0
      %356 = vmatpush1.msra.mxu0 0.0
      %357 = vmatprep.subr.mxu0 0.0
      %358 = vmatpush1.msra.mxu0 0.0
      %359 = vmatprep.subr.mxu0 0.0
      %360 = vmatpush1.msra.mxu0 0.0
      %361 = vmatprep.subr.mxu0 0.0
      %362 = vmatpush1.msra.mxu0 0.0
      %363 = vmatprep.subr.mxu0 0.0
      %364 = vmatpush1.msra.mxu0 0.0
      %365 = vmatprep.subr.mxu0 0.0
      %366 = vmatpush1.msra.mxu0 0.0
      %367 = vmatprep.subr.mxu0 0.0
      %368 = vmatpush1.msra.mxu0 0.0
      %369 = vmatprep.subr.mxu0 0.0
      %370 = vmatpush1.msra.mxu0 0.0
      %371 = vmatprep.subr.mxu0 0.0
      %372 = vmatpush1.msra.mxu0 0.0
      %373 = vmatprep.subr.mxu0 0.0
      %374 = vmatpush1.msra.mxu0 0.0
      %375 = vmatprep.subr.mxu0 0.0
      %376 = vmatpush1.msra.mxu0 0.0
      %377 = vmatprep.subr.mxu0 0.0
      %378 = vmatpush1.msra.mxu0 0.0
      %379 = vmatprep.mubr.f32.mxu0 0.0
      %380 = vmatmul.mubr.f32.gmra.mrb[0].mxu0 %v308
      %v381 = vpop.f32.mrb[0].mxu0
      %v382 = vadd.f32 0.0, %v381
      %v383 = vpop.f32.mrb[0].mxu0
      %v384 = vadd.f32 0.0, %v383
      %385 = vdwg.mxu0
      %v387 = vcombine.high %v301, %v301
      %v389 = vsel %vm306, %v300, 0
      %v391 = vsel %vm310, %v301, 0
      %v393 = vsel %vm310, %v387, 0
      %395 = vmatprep.subr.mxu0 %v393
      %396 = vmatpush1.msra.mxu0 %v391
      %397 = vmatprep.subr.mxu0 0.0
      %398 = vmatpush1.msra.mxu0 0.0
      %399 = vmatprep.subr.mxu0 0.0
      %400 = vmatpush1.msra.mxu0 0.0
      %401 = vmatprep.subr.mxu0 0.0
      %402 = vmatpush1.msra.mxu0 0.0
      %403 = vmatprep.subr.mxu0 0.0
      %404 = vmatpush1.msra.mxu0 0.0
      %405 = vmatprep.subr.mxu0 0.0
      %406 = vmatpush1.msra.mxu0 0.0
      %407 = vmatprep.subr.mxu0 0.0
      %408 = vmatpush1.msra.mxu0 0.0
      %409 = vmatprep.subr.mxu0 0.0
      %410 = vmatpush1.msra.mxu0 0.0
      %411 = vmatprep.subr.mxu0 0.0
      %412 = vmatpush1.msra.mxu0 0.0
      %413 = vmatprep.subr.mxu0 0.0
      %414 = vmatpush1.msra.mxu0 0.0
      %415 = vmatprep.subr.mxu0 0.0
      %416 = vmatpush1.msra.mxu0 0.0
      %417 = vmatprep.subr.mxu0 0.0
      %418 = vmatpush1.msra.mxu0 0.0
      %419 = vmatprep.subr.mxu0 0.0
      %420 = vmatpush1.msra.mxu0 0.0
      %421 = vmatprep.subr.mxu0 0.0
      %422 = vmatpush1.msra.mxu0 0.0
      %423 = vmatprep.subr.mxu0 0.0
      %424 = vmatpush1.msra.mxu0 0.0
      %425 = vmatprep.subr.mxu0 0.0
      %426 = vmatpush1.msra.mxu0 0.0
      %427 = vmatprep.subr.mxu0 0.0
      %428 = vmatpush1.msra.mxu0 0.0
      %429 = vmatprep.subr.mxu0 0.0
      %430 = vmatpush1.msra.mxu0 0.0
      %431 = vmatprep.subr.mxu0 0.0
      %432 = vmatpush1.msra.mxu0 0.0
      %433 = vmatprep.subr.mxu0 0.0
      %434 = vmatpush1.msra.mxu0 0.0
      %435 = vmatprep.subr.mxu0 0.0
      %436 = vmatpush1.msra.mxu0 0.0
      %437 = vmatprep.subr.mxu0 0.0
      %438 = vmatpush1.msra.mxu0 0.0
      %439 = vmatprep.subr.mxu0 0.0
      %440 = vmatpush1.msra.mxu0 0.0
      %441 = vmatprep.subr.mxu0 0.0
      %442 = vmatpush1.msra.mxu0 0.0
      %443 = vmatprep.subr.mxu0 0.0
      %444 = vmatpush1.msra.mxu0 0.0
      %445 = vmatprep.subr.mxu0 0.0
      %446 = vmatpush1.msra.mxu0 0.0
      %447 = vmatprep.subr.mxu0 0.0
      %448 = vmatpush1.msra.mxu0 0.0
      %449 = vmatprep.subr.mxu0 0.0
      %450 = vmatpush1.msra.mxu0 0.0
      %451 = vmatprep.subr.mxu0 0.0
      %452 = vmatpush1.msra.mxu0 0.0
      %453 = vmatprep.subr.mxu0 0.0
      %454 = vmatpush1.msra.mxu0 0.0
      %455 = vmatprep.subr.mxu0 0.0
      %456 = vmatpush1.msra.mxu0 0.0
      %457 = vmatprep.subr.mxu0 0.0
      %458 = vmatpush1.msra.mxu0 0.0
      %459 = vmatprep.mubr.f32.mxu0 0.0
      %460 = vmatmul.mubr.f32.gmra.mrb[0].mxu0 %v389
      %v461 = vpop.f32.mrb[0].mxu0
      %v462 = vadd.f32 %v382, %v461
      %v463 = vpop.f32.mrb[0].mxu0
      %v464 = vadd.f32 %v384, %v463
      %465 = vdwg.mxu0
      %v466 = vld [vmem:[%s4] sm:$0xff]
      %468 = vset.pattern.permute.xlu0 0
      %469 = vperm.xlu0 %468, %v466
      %v470 = vpop.permute.xlu0 %469
      %v472 = vadd.f32 %v462, %v470
      %v473 = vadd.f32 %v464, %v470
      %v474 = vmax.f32 %v472, 0.0
      %v475 = vmax.f32 %v473, 0.0
      %476 = vst [vmem:[%s298] sm:$0xff] %v474
      %477 = vst [vmem:[%s298 + $0x8] sm:$0xff] %v475
      %s478 = smul.u32 2, %s21
      %p479 = scmp.lt.s32.totalorder %s20, 1
      %s480 = scalar_select %p479, %s20, 1
      %p481 = scmp.lt.s32.totalorder %s478, 1
      %s482 = scalar_select %p481, %s478, 1
      %s483 = smul.addr %s480, 2
      %s484 = sadd.s32 %s482, %s483
      %s485 = smul.addr %s484, 8
      %s486 = scalar_lea.vmem %s5, %s485
      // Predicated region
      $region41: #{root_forward.1} parent=39 // pred_check
        %p487 = pneg %p167
      $region42: #{root_forward.1} parent=39 // pred_check_branch
        %489 = sbr.rel (%p487) target = $region44
      $region43: #{root_forward.1} parent=39 // pred_region
        %s490 = smul.u32 2, %s21
      $region44: #{root_forward.1} parent=39 // pred_fallthru
        _
    $region40: #{root_forward.1} parent=5 // pred_fallthru
      _
    %p491 = scmp.le.s32.totalorder 2, %s11
    // Predicated region
    $region45: #{root_forward.1} parent=5 // pred_check
      %p492 = pneg %p491
    $region46: #{root_forward.1} parent=5 // pred_check_branch
      %494 = sbr.rel (%p492) target = $region48
    $region47: #{root_forward.1} parent=5 // pred_region
      %s495 = ssub.s32 %s11, 2
      // Predicated region
      $region49: #{root_forward.1} parent=47 // pred_check
        %p496 = pneg %p173
      $region50: #{root_forward.1} parent=47 // pred_check_branch
        %498 = sbr.rel (%p496) target = $region52
      $region51: #{root_forward.1} parent=47 // pred_region
        %s499 = smul.u32 2, %s23
        %p500 = scmp.lt.s32.totalorder %s22, 1
        %s501 = scalar_select %p500, %s22, 1
        %p502 = scmp.lt.s32.totalorder %s499, 1
        %s503 = scalar_select %p502, %s499, 1
        %s504 = smul.addr %s501, 2
        %s505 = sadd.s32 %s503, %s504
        %s506 = smul.addr %s505, 8
        %s507 = scalar_lea.vmem %s5, %s506
      $region52: #{root_forward.1} parent=47 // pred_fallthru
        _
    $region48: #{root_forward.1} parent=5 // pred_fallthru
      _
  $region6: #{root_forward.1} parent=0 // loop_footer
    %s15 = sadd.s32 1, %s11
  $region7: #{root_forward.1} parent=0 // loop_footer_branch
    %10 = sbr.rel target = $region3
  $region8: #{root_forward.1} parent=0 // loop_exit
    _

</llo_original>
